<compile_context>
chip_gen: v5e
topology: v5e:2x2
jax: 0.10.0
libtpu: 0.0.40
codegen_flags: <defaults>
</compile_context>

<pallas_src>
import functools

import jax
import jax.numpy as jnp
from jax.experimental import pallas as pl
from jax.experimental.pallas import tpu as pltpu


def _pos_embed_kernel(emb_ref, row0_ref, pos_rest_ref, out_ref, *, hidden, aligned):
    """One batch-block of rows.

    emb_ref:      (bb, N*H)       patch embeddings, seq x hidden flattened on lanes
    row0_ref:     (1, H)          batch-invariant cls_token + pos[0]
    pos_rest_ref: (1, N*H)        pos[1:], flattened
    out_ref:      (bb, (N+1)*H)
    """
    bb = out_ref.shape[0]
    rest = (emb_ref[...] + pos_rest_ref[...]).astype(out_ref.dtype)
    row0 = jnp.broadcast_to(row0_ref[...], (bb, hidden)).astype(out_ref.dtype)
    if aligned:
        # H % 128 == 0: two lane-aligned sub-range stores (zero lane shuffles).
        out_ref[:, :hidden] = row0
        out_ref[:, hidden:] = rest
    else:
        # Unaligned hidden (tiny test sizes): build the slab once, single
        # full-tile lane-dense store.
        out_ref[...] = jnp.concatenate([row0, rest], axis=-1)


def _vmem_budget_and_limit():
    """Generation-aware VMEM budget (v5e/v6e: 128 MiB physical, v7x: 64 MiB)."""
    capacity = 64 * 1024 * 1024            # conservative default (v7x-sized)
    try:
        cap = getattr(pltpu.get_tpu_info(), "vmem_capacity_bytes", None)
        if cap:
            capacity = int(cap)
    except Exception:
        pass
    budget = capacity // 2                 # double-buffered in+out block payload
    limit = min((capacity * 3) // 4, 100 * 1024 * 1024)
    return budget, limit


def _pick_block_batch(batch, row_bytes, pack, budget_bytes, min_block_bytes=4 << 20):
    """Batch rows per grid step for the flattened (seq*hidden) slab."""
    cap = max(1, budget_bytes // max(2 * row_bytes, 1))   # double-buffered blocks
    if cap < batch:
        bb = cap                                           # VMEM-budget limited
    else:
        # Whole batch fits: still split into a few steps so input fetch /
        # output writeback overlap and the grid shards across TensorCores.
        target_steps = 4 if batch >= 4 * pack else 2
        bb = -(-batch // target_steps)
        # Keep block payloads >= ~min_block_bytes (per-step fixed overhead), but
        # never collapse below 2 grid steps just to satisfy the floor.
        floor_rows = max(1, min_block_bytes // max(row_bytes, 1))
        if floor_rows > bb:
            bb = min(floor_rows, -(-batch // 2))
        bb = min(bb, cap)
    # Dtype-aware sublane packing (8 f32 / 16 bf16 / 32 int8): full vregs and
    # unmasked sublane stores. Round up if it still fits the budget/batch.
    if bb >= pack:
        up = -(-bb // pack) * pack
        bb = up if up <= min(cap, batch) else max(pack, (bb // pack) * pack)
    return max(1, min(bb, batch))


def position_embedding_forward(embeddings, cls_token, position_embeddings,
                               *, block_batch=None):
    """embeddings: (B, N, H); cls_token: (1, 1, H); pos: (1, N+1, H)."""
    B, N, H = embeddings.shape
    assert cls_token.shape == (1, 1, H)
    assert position_embeddings.shape == (1, N + 1, H)

    out_dtype = jnp.result_type(embeddings.dtype, cls_token.dtype,
                                position_embeddings.dtype)
    L_in, L_out = N * H, (N + 1) * H
    emb_item = jnp.dtype(embeddings.dtype).itemsize
    out_item = jnp.dtype(out_dtype).itemsize

    # Batch-invariant prep (tiny, done once). Kept in the promoted dtype so
    # mixed-precision adds round like the PyTorch reference.
    row0 = (cls_token[:, 0, :] + position_embeddings[:, 0, :]).astype(out_dtype)  # (1, H)
    pos_rest = position_embeddings[:, 1:, :].reshape(1, L_in).astype(out_dtype)   # (1, N*H)
    emb2 = embeddings.reshape(B, L_in)

    row_bytes = emb_item * L_in + out_item * L_out
    pack = max(8, 32 // out_item)
    budget, vmem_limit = _vmem_budget_and_limit()

    bb = block_batch if block_batch is not None else _pick_block_batch(
        B, row_bytes, pack, budget)
    bb = max(1, min(int(bb), B))
    if B % bb != 0 and bb % 8 != 0:
        # Ragged (cdiv) grids need sublane-aligned blocks; otherwise fall back
        # to the largest divisor of B (the divisible path has no constraint).
        while B % bb != 0:
            bb -= 1

    kernel = functools.partial(_pos_embed_kernel, hidden=H, aligned=(H % 128 == 0))
    cost = pl.CostEstimate(
        flops=B * L_out,
        transcendentals=0,
        bytes_accessed=emb_item * B * L_in + out_item * (L_in + H + B * L_out),
    )
    compiler_params = pltpu.CompilerParams(
        dimension_semantics=("parallel",),
        vmem_limit_bytes=vmem_limit,
    )

    def run(use_buffered):
        rep_kwargs = dict(pipeline_mode=pl.Buffered(1)) if use_buffered else {}
        rep_specs = [
            pl.BlockSpec((1, H), lambda g: (0, 0), **rep_kwargs),
            pl.BlockSpec((1, L_in), lambda g: (0, 0), **rep_kwargs),
        ]
        if B % bb == 0:
            # (G, bb, L) view: block trailing dims == full array dims, so any bb
            # that divides B is layout-legal; the leading dim is squeezed away.
            G = B // bb
            emb_v = emb2.reshape(G, bb, L_in)
            in_specs = [pl.BlockSpec((None, bb, L_in), lambda g: (g, 0, 0))] + rep_specs
            out_specs = pl.BlockSpec((None, bb, L_out), lambda g: (g, 0, 0))
            out_shape = jax.ShapeDtypeStruct((G, bb, L_out), out_dtype)
        else:
            # Non-divisor batch: cdiv grid over the 2-D (B, L) view; the ragged
            # last block is masked on writeback. bb is a multiple of 8 here.
            G = pl.cdiv(B, bb)
            emb_v = emb2
            in_specs = [pl.BlockSpec((bb, L_in), lambda g: (g, 0))] + rep_specs
            out_specs = pl.BlockSpec((bb, L_out), lambda g: (g, 0))
            out_shape = jax.ShapeDtypeStruct((B, L_out), out_dtype)

        return pl.pallas_call(
            kernel,
            out_shape=out_shape,
            grid_spec=pltpu.PrefetchScalarGridSpec(
                num_scalar_prefetch=0,
                grid=(G,),
                in_specs=in_specs,
                out_specs=out_specs,
            ),
            compiler_params=compiler_params,
            cost_estimate=cost,
        )(emb_v, row0, pos_rest)

    try:
        out = run(use_buffered=True)
    except Exception:
        # pipeline_mode / Buffered(1) not supported on this JAX version — fall
        # back to default double-buffering of the two tiny replicated inputs.
        out = run(use_buffered=False)

    return out.reshape(B, N + 1, H)


def _reference(embeddings, cls_token, position_embeddings):
    B = embeddings.shape[0]
    cls_expand = jnp.broadcast_to(cls_token, (B, 1, cls_token.shape[-1]))
    return jnp.concatenate([cls_expand, embeddings], axis=1) + position_embeddings


if __name__ == "__main__":
    key = jax.random.PRNGKey(0)

    # --- Small shapes consistent with the module's forward (unaligned-H path).
    batch, num_patches, hidden_size = 2, 8, 32
    k_emb, k_pos, k_emb2, k_pos2 = jax.random.split(key, 4)

    # Parameter init matching the module's __init__:
    #   cls_token: zeros(1, 1, hidden); position_embeddings: trunc_normal(std=0.02).
    cls_token = jnp.zeros((1, 1, hidden_size), dtype=jnp.float32)
    position_embeddings = 0.02 * jax.random.truncated_normal(
        k_pos, -2.0, 2.0, (1, num_patches + 1, hidden_size), dtype=jnp.float32)
    embeddings = jax.random.normal(
        k_emb, (batch, num_patches, hidden_size), dtype=jnp.float32)

    out = jax.block_until_ready(
        position_embedding_forward(embeddings, cls_token, position_embeddings))
    ref = _reference(embeddings, cls_token, position_embeddings)
    assert out.shape == (batch, num_patches + 1, hidden_size)
    assert jnp.allclose(out, ref, atol=1e-6), "mismatch vs reference (unaligned H)"

    # --- Second config exercising the 128-aligned two-store path + multi-step grid.
    b2, n2, h2 = 16, 4, 128
    cls2 = jnp.zeros((1, 1, h2), dtype=jnp.float32)
    pos2 = 0.02 * jax.random.truncated_normal(
        k_pos2, -2.0, 2.0, (1, n2 + 1, h2), dtype=jnp.float32)
    emb2 = jax.random.normal(k_emb2, (b2, n2, h2), dtype=jnp.float32)

    out2 = jax.block_until_ready(position_embedding_forward(emb2, cls2, pos2))
    ref2 = _reference(emb2, cls2, pos2)
    assert out2.shape == (b2, n2 + 1, h2)
    assert jnp.allclose(out2, ref2, atol=1e-6), "mismatch vs reference (aligned H)"

    print("KERNEL_OK")
</pallas_src>

<mosaic_0001>
module attributes {stable_mosaic.version = 11 : i64} {
  func.func @_pos_embed_kernel(%arg0: i32, %arg1: memref<1x1x256xf32, #tpu.memory_space<vmem>>, %arg2: memref<1x32xf32, #tpu.memory_space<vmem>>, %arg3: memref<1x256xf32, #tpu.memory_space<vmem>>, %arg4: memref<1x1x288xf32, #tpu.memory_space<vmem>>) attributes {dimension_semantics = [#tpu.dimension_semantics<parallel>], iteration_bounds = array<i64: 2>, scalar_prefetch = 0 : i64, scratch_operands = 0 : i64, tpu.core_type = #tpu.core_type<tc>, window_params = [{transform_indices = @transform_0, window_bounds = array<i64: 1, 1, 256>}, {pipeline_mode = #tpu.pipeline_mode<synchronous>, transform_indices = @transform_1, window_bounds = array<i64: 1, 32>}, {pipeline_mode = #tpu.pipeline_mode<synchronous>, transform_indices = @transform_2, window_bounds = array<i64: 1, 256>}, {transform_indices = @transform_3, window_bounds = array<i64: 1, 1, 288>}]} {
    %c0 = arith.constant 0 : index
    %c0_0 = arith.constant 0 : index
    %c0_1 = arith.constant 0 : index
    %0 = vector.load %arg1[%c0, %c0_0, %c0_1] : memref<1x1x256xf32, #tpu.memory_space<vmem>>, vector<1x1x256xf32>
    %1 = vector.shape_cast %0 : vector<1x1x256xf32> to vector<1x256xf32>
    %c0_2 = arith.constant 0 : index
    %c0_3 = arith.constant 0 : index
    %2 = vector.load %arg3[%c0_2, %c0_3] : memref<1x256xf32, #tpu.memory_space<vmem>>, vector<1x256xf32>
    %3 = arith.addf %1, %2 : vector<1x256xf32>
    %c0_4 = arith.constant 0 : index
    %c0_5 = arith.constant 0 : index
    %4 = vector.load %arg2[%c0_4, %c0_5] : memref<1x32xf32, #tpu.memory_space<vmem>>, vector<1x32xf32>
    %5 = tpu.concatenate %4, %3 in 1 : vector<1x32xf32>, vector<1x256xf32> -> vector<1x288xf32>
    %c0_6 = arith.constant 0 : index
    %c0_7 = arith.constant 0 : index
    %c0_8 = arith.constant 0 : index
    %6 = vector.load %arg4[%c0_6, %c0_7, %c0_8] : memref<1x1x288xf32, #tpu.memory_space<vmem>>, vector<1x1x288xf32>
    %7 = vector.shape_cast %6 : vector<1x1x288xf32> to vector<1x288xf32>
    %8 = vector.shape_cast %5 : vector<1x288xf32> to vector<1x1x288xf32>
    tpu.vector_store %arg4[%c0_6, %c0_7, %c0_8], %8 {strides = array<i32>} : memref<1x1x288xf32, #tpu.memory_space<vmem>>, vector<1x1x288xf32>,
    return
  }
  func.func @transform_0(%arg0: i32) -> (i32, i32, i32) {
    %c0_i32 = arith.constant 0 : i32
    %c0_i32_0 = arith.constant 0 : i32
    %c0_i32_1 = arith.constant 0 : i32
    return %arg0, %c0_i32, %c0_i32_0 : i32, i32, i32
  }
  func.func @transform_1(%arg0: i32) -> (i32, i32) {
    %c0_i32 = arith.constant 0 : i32
    %c0_i32_0 = arith.constant 0 : i32
    %c0_i32_1 = arith.constant 0 : i32
    return %c0_i32, %c0_i32_0 : i32, i32
  }
  func.func @transform_2(%arg0: i32) -> (i32, i32) {
    %c0_i32 = arith.constant 0 : i32
    %c0_i32_0 = arith.constant 0 : i32
    %c0_i32_1 = arith.constant 0 : i32
    return %c0_i32, %c0_i32_0 : i32, i32
  }
  func.func @transform_3(%arg0: i32) -> (i32, i32, i32) {
    %c0_i32 = arith.constant 0 : i32
    %c0_i32_0 = arith.constant 0 : i32
    %c0_i32_1 = arith.constant 0 : i32
    return %arg0, %c0_i32, %c0_i32_0 : i32, i32, i32
  }
}

module attributes {stable_mosaic.version = 11 : i64} {
  func.func @_pos_embed_kernel(%arg0: i32, %arg1: memref<1x1x256xf32, #tpu.memory_space<vmem>>, %arg2: memref<1x32xf32, #tpu.memory_space<vmem>>, %arg3: memref<1x256xf32, #tpu.memory_space<vmem>>, %arg4: memref<1x1x288xf32, #tpu.memory_space<vmem>>) attributes {dimension_semantics = [#tpu.dimension_semantics<parallel>], iteration_bounds = array<i64: 2>, scalar_prefetch = 0 : i64, scratch_operands = 0 : i64, tpu.core_type = #tpu.core_type<tc>, window_params = [{transform_indices = @transform_0, window_bounds = array<i64: 1, 1, 256>}, {pipeline_mode = #tpu.pipeline_mode<synchronous>, transform_indices = @transform_1, window_bounds = array<i64: 1, 32>}, {pipeline_mode = #tpu.pipeline_mode<synchronous>, transform_indices = @transform_2, window_bounds = array<i64: 1, 256>}, {transform_indices = @transform_3, window_bounds = array<i64: 1, 1, 288>}]} {
    %c0 = arith.constant 0 : index
    %c0_0 = arith.constant 0 : index
    %c0_1 = arith.constant 0 : index
    %0 = vector.load %arg1[%c0, %c0_0, %c0_1] : memref<1x1x256xf32, #tpu.memory_space<vmem>>, vector<1x1x256xf32>
    %1 = vector.shape_cast %0 : vector<1x1x256xf32> to vector<1x256xf32>
    %c0_2 = arith.constant 0 : index
    %c0_3 = arith.constant 0 : index
    %2 = vector.load %arg3[%c0_2, %c0_3] : memref<1x256xf32, #tpu.memory_space<vmem>>, vector<1x256xf32>
    %3 = arith.addf %1, %2 : vector<1x256xf32>
    %c0_4 = arith.constant 0 : index
    %c0_5 = arith.constant 0 : index
    %4 = vector.load %arg2[%c0_4, %c0_5] : memref<1x32xf32, #tpu.memory_space<vmem>>, vector<1x32xf32>
    %5 = tpu.concatenate %4, %3 in 1 : vector<1x32xf32>, vector<1x256xf32> -> vector<1x288xf32>
    %c0_6 = arith.constant 0 : index
    %c0_7 = arith.constant 0 : index
    %c0_8 = arith.constant 0 : index
    %6 = vector.load %arg4[%c0_6, %c0_7, %c0_8] : memref<1x1x288xf32, #tpu.memory_space<vmem>>, vector<1x1x288xf32>
    %7 = vector.shape_cast %6 : vector<1x1x288xf32> to vector<1x288xf32>
    %8 = vector.shape_cast %5 : vector<1x288xf32> to vector<1x1x288xf32>
    tpu.vector_store %arg4[%c0_6, %c0_7, %c0_8], %8 {strides = array<i32>} : memref<1x1x288xf32, #tpu.memory_space<vmem>>, vector<1x1x288xf32>,
    return
  }
  func.func @transform_0(%arg0: i32) -> (i32, i32, i32) {
    %c0_i32 = arith.constant 0 : i32
    %c0_i32_0 = arith.constant 0 : i32
    %c0_i32_1 = arith.constant 0 : i32
    return %arg0, %c0_i32, %c0_i32_0 : i32, i32, i32
  }
  func.func @transform_1(%arg0: i32) -> (i32, i32) {
    %c0_i32 = arith.constant 0 : i32
    %c0_i32_0 = arith.constant 0 : i32
    %c0_i32_1 = arith.constant 0 : i32
    return %c0_i32, %c0_i32_0 : i32, i32
  }
  func.func @transform_2(%arg0: i32) -> (i32, i32) {
    %c0_i32 = arith.constant 0 : i32
    %c0_i32_0 = arith.constant 0 : i32
    %c0_i32_1 = arith.constant 0 : i32
    return %c0_i32, %c0_i32_0 : i32, i32
  }
  func.func @transform_3(%arg0: i32) -> (i32, i32, i32) {
    %c0_i32 = arith.constant 0 : i32
    %c0_i32_0 = arith.constant 0 : i32
    %c0_i32_1 = arith.constant 0 : i32
    return %arg0, %c0_i32, %c0_i32_0 : i32, i32, i32
  }
}

</mosaic_0001>

<llo_original>
// kernel: tpu_custom_call.1
$region0: #{tpu_custom_call.1}
  #allocation0 [shape = 'u32[]', space=smem, size = 0x4, offset = 0x4, fixed_abs, tag = 'smem constant byte address 0x4 - core index']
  #allocation1 [shape = 'u32[72,128]{1,0:T(1,128)}', space=vmem, size = 0x9000, scoped, tag = 'internal scratch']
  %s0 = inlined_call_operand.hbm [shape: f32[2,1,256], index: 0, kind: input, shape index: {}]
  %s1 = inlined_call_operand.hbm [shape: f32[1,32], index: 1, kind: input, shape index: {}]
  %s2 = inlined_call_operand.hbm [shape: f32[1,256], index: 2, kind: input, shape index: {}]
  %s3 = inlined_call_operand.hbm [shape: f32[2,1,288], index: 3, kind: output, shape index: {}]
  %s4 = sld [smem:[#allocation0]]
  $region57: #{tpu_custom_call.1} parent=0
    _
  %s6 = ssub.s32 1, %s4
  %s7 = scalar_select 0, %s6, %s4
  $region1: #{tpu_custom_call.1} parent=0
    #allocation2 [shape = 'u8[2048]{0}', space=vmem, size = 0x800, scoped, tag = 'input window, operand 0']
    #allocation3 [shape = 's32[2]{0}', space=sflag, size = 0x8, scoped, tag = 'scoped memory for tpu_custom_call.1']
    #allocation4 [shape = 's32[2]{0}', space=sflag, size = 0x8, scoped, tag = 'scoped memory for tpu_custom_call.1']
    #allocation5 [shape = 'u8[512]{0}', space=vmem, size = 0x400, scoped, tag = 'input window, operand 1, single buffered']
    #allocation6 [shape = 's32[1]{0}', space=sflag, size = 0x4, scoped, tag = 'scoped memory for tpu_custom_call.1']
    #allocation7 [shape = 'u8[1024]{0}', space=vmem, size = 0x400, scoped, tag = 'input window, operand 2, single buffered']
    #allocation8 [shape = 'u8[3072]{0}', space=vmem, size = 0xc00, scoped, tag = 'output window, operand 0']
    %8 = vsyncpa [#allocation3], 0
    %s9 = scalar_lea.sflag [#allocation3], 1
    %10 = vsyncpa %s9, 0
    %11 = vsyncpa [#allocation6], 0
    %12 = vsyncpa [#allocation4], 0
    %s13 = scalar_lea.sflag [#allocation4], 1
    %14 = vsyncpa %s13, 0
    loop: start=0, step=1, limit=4
    $region2: #{tpu_custom_call.1} parent=1 // loop_pre_header
      _
    $region3: #{tpu_custom_call.1} parent=1 // loop_header
      %s16 = sphi 0, %s20
      %p17 = scmp.ge.s32.totalorder %s16, 4
      %s26 = sphi 0, %s28
      %s29 = sphi 0, %s26
      %s30 = sphi 0, %s29
      %s46 = sphi 0, %s30
      %s50 = sphi 0, %s50
      %s52 = sphi 0, %s50
      %s53 = sphi 0, %s52
      %s67 = sphi 0, %s53
      %s71 = sphi 0, %s71
      %s73 = sphi 0, %s71
      %s74 = sphi 0, %s73
      %s88 = sphi 0, %s74
      %s94 = sphi 0, %s96
      %s97 = sphi 0, %s94
      %s98 = sphi 0, %s97
      %s114 = sphi 0, %s98
    $region4: #{tpu_custom_call.1} parent=1 // loop_header_branch
      %19 = sbr.rel (%p17) target = $region8
    $region5: #{tpu_custom_call.1} parent=1 // loop_body
      %s21 = ssub.s32 %s16, 1
      %s22 = ssub.s32 %s16, 2
      %s23 = sadd.s32 %s16, 1
      %s24 = ssub.s32 %s16, %s23
      %p25 = scmp.eq.s32.totalorder %s24, 0
      %s27 = sadd.s32 %s26, 1
      %s28 = scalar_select %p25, %s26, %s27
      %p31 = pneg %p25
      %p32 = scmp.eq.s32.totalorder %s16, 1
      %p33 = por %p31, %p32
      %p34 = scmp.ne.s32.totalorder %s26, %s29
      %p35 = scmp.eq.s32.totalorder %s16, 0
      %p36 = por %p34, %p35
      %p37 = scmp.ne.s32.totalorder %s26, %s29
      %p38 = scmp.eq.s32.totalorder %s21, 1
      %p39 = por %p37, %p38
      %p40 = scmp.ne.s32.totalorder %s29, %s30
      %p41 = scmp.eq.s32.totalorder %s21, 0
      %p42 = por %p40, %p41
      %p43 = scmp.ne.s32.totalorder %s29, %s30
      %p44 = scmp.eq.s32.totalorder %s22, 1
      %p45 = por %p43, %p44
      %p47 = scmp.ne.s32.totalorder %s30, %s46
      %p48 = scmp.eq.s32.totalorder %s22, 0
      %p49 = por %p47, %p48
      %s51 = sadd.s32 %s50, 1
      %p54 = scmp.eq.s32.totalorder %s16, 1
      %p55 = scmp.ne.s32.totalorder %s50, %s52
      %p56 = scmp.eq.s32.totalorder %s16, 0
      %p57 = por %p55, %p56
      %p58 = scmp.ne.s32.totalorder %s50, %s52
      %p59 = scmp.eq.s32.totalorder %s21, 1
      %p60 = por %p58, %p59
      %p61 = scmp.ne.s32.totalorder %s52, %s53
      %p62 = scmp.eq.s32.totalorder %s21, 0
      %p63 = por %p61, %p62
      %p64 = scmp.ne.s32.totalorder %s52, %s53
      %p65 = scmp.eq.s32.totalorder %s22, 1
      %p66 = por %p64, %p65
      %p68 = scmp.ne.s32.totalorder %s53, %s67
      %p69 = scmp.eq.s32.totalorder %s22, 0
      %p70 = por %p68, %p69
      %s72 = sadd.s32 %s71, 1
      %p75 = scmp.eq.s32.totalorder %s16, 1
      %p76 = scmp.ne.s32.totalorder %s71, %s73
      %p77 = scmp.eq.s32.totalorder %s16, 0
      %p78 = por %p76, %p77
      %p79 = scmp.ne.s32.totalorder %s71, %s73
      %p80 = scmp.eq.s32.totalorder %s21, 1
      %p81 = por %p79, %p80
      %p82 = scmp.ne.s32.totalorder %s73, %s74
      %p83 = scmp.eq.s32.totalorder %s21, 0
      %p84 = por %p82, %p83
      %p85 = scmp.ne.s32.totalorder %s73, %s74
      %p86 = scmp.eq.s32.totalorder %s22, 1
      %p87 = por %p85, %p86
      %p89 = scmp.ne.s32.totalorder %s74, %s88
      %p90 = scmp.eq.s32.totalorder %s22, 0
      %p91 = por %p89, %p90
      %s92 = ssub.s32 %s16, %s23
      %p93 = scmp.eq.s32.totalorder %s92, 0
      %s95 = sadd.s32 %s94, 1
      %s96 = scalar_select %p93, %s94, %s95
      %p99 = pneg %p93
      %p100 = scmp.eq.s32.totalorder %s16, 1
      %p101 = por %p99, %p100
      %p102 = scmp.ne.s32.totalorder %s94, %s97
      %p103 = scmp.eq.s32.totalorder %s16, 0
      %p104 = por %p102, %p103
      %p105 = scmp.ne.s32.totalorder %s94, %s97
      %p106 = scmp.eq.s32.totalorder %s21, 1
      %p107 = por %p105, %p106
      %p108 = scmp.ne.s32.totalorder %s97, %s98
      %p109 = scmp.eq.s32.totalorder %s21, 0
      %p110 = por %p108, %p109
      %p111 = scmp.ne.s32.totalorder %s97, %s98
      %p112 = scmp.eq.s32.totalorder %s22, 1
      %p113 = por %p111, %p112
      %p115 = scmp.ne.s32.totalorder %s98, %s114
      %p116 = scmp.eq.s32.totalorder %s22, 0
      %p117 = por %p115, %p116
      %p118 = scmp.le.s32.totalorder 1, %s16
      %p119 = scmp.lt.s32.totalorder %s16, 3
      %p120 = pnand %p118, %p119
      %p121 = pneg %p120
      // Predicated region
      $region9: #{tpu_custom_call.1} parent=5 // pred_check
        _
      $region10: #{tpu_custom_call.1} parent=5 // pred_check_branch
        %123 = sbr.rel (%p120) target = $region12
      $region11: #{tpu_custom_call.1} parent=5 // pred_region
        %s124 = ssub.s32 %s16, 1
        // Predicated region
        $region13: #{tpu_custom_call.1} parent=11 // pred_check
          %p125 = pneg %p63
        $region14: #{tpu_custom_call.1} parent=11 // pred_check_branch
          %127 = sbr.rel (%p125) target = $region16
        $region15: #{tpu_custom_call.1} parent=11 // pred_region
          %129 = vsyncadd [#allocation6], 0
          %s131 = sshll.u32 %s1, 4
          %s132 = int_to_ptr.hbm [resolvable:$true] %s131
          %s133 = sshll.u32 [#allocation5], 4
          %s134 = int_to_ptr.vmem [resolvable:$true] %s133
          %136 = dma.hbm_to_vmem [thread:$0]  %s132, 16, %s134, [#allocation6]
        $region16: #{tpu_custom_call.1} parent=11 // pred_fallthru
          _
        // Predicated region
        $region17: #{tpu_custom_call.1} parent=11 // pred_check
          %p137 = pneg %p84
        $region18: #{tpu_custom_call.1} parent=11 // pred_check_branch
          %139 = sbr.rel (%p137) target = $region20
        $region19: #{tpu_custom_call.1} parent=11 // pred_region
          %141 = vsyncadd [#allocation6], 0
          %s143 = sshll.u32 %s2, 4
          %s144 = int_to_ptr.hbm [resolvable:$true] %s143
          %s145 = sshll.u32 [#allocation7], 4
          %s146 = int_to_ptr.vmem [resolvable:$true] %s145
          %148 = dma.hbm_to_vmem [thread:$0]  %s144, 32, %s146, [#allocation6]
        $region20: #{tpu_custom_call.1} parent=11 // pred_fallthru
          _
      $region12: #{tpu_custom_call.1} parent=5 // pred_fallthru
        _
      %p149 = scmp.lt.s32.totalorder %s16, 2
      // Predicated region
      $region21: #{tpu_custom_call.1} parent=5 // pred_check
        %p150 = pneg %p149
      $region22: #{tpu_custom_call.1} parent=5 // pred_check_branch
        %152 = sbr.rel (%p150) target = $region24
      $region23: #{tpu_custom_call.1} parent=5 // pred_region
        // Predicated region
        $region25: #{tpu_custom_call.1} parent=23 // pred_check
          %p153 = pneg %p36
        $region26: #{tpu_custom_call.1} parent=23 // pred_check_branch
          %155 = sbr.rel (%p153) target = $region28
        $region27: #{tpu_custom_call.1} parent=23 // pred_region
          %s156 = sand.u32 %s26, 1
          %s157 = scalar_lea.sflag [#allocation3], %s156
          %s158 = sand.u32 %s26, 1
          %s159 = smul.addr %s158, 2
          %s160 = scalar_lea.vmem [#allocation2], %s159
          %162 = vsyncadd %s157, 0
          %s163 = smul.addr %s16, 2
          %s164 = scalar_lea.hbm %s0, %s163
          %s166 = sshll.u32 %s164, 4
          %s167 = int_to_ptr.hbm [resolvable:$true] %s166
          %s168 = sshll.u32 %s160, 4
          %s169 = int_to_ptr.vmem [resolvable:$true] %s168
          %171 = dma.hbm_to_vmem [thread:$0]  %s167, 32, %s169, %s157
        $region28: #{tpu_custom_call.1} parent=23 // pred_fallthru
          _
      $region24: #{tpu_custom_call.1} parent=5 // pred_fallthru
        _
      %p172 = scmp.le.s32.totalorder 1, %s16
      %p173 = scmp.lt.s32.totalorder %s16, 3
      %p174 = pnand %p172, %p173
      %p175 = pneg %p174
      // Predicated region
      $region29: #{tpu_custom_call.1} parent=5 // pred_check
        _
      $region30: #{tpu_custom_call.1} parent=5 // pred_check_branch
        %177 = sbr.rel (%p174) target = $region32
      $region31: #{tpu_custom_call.1} parent=5 // pred_region
        %s178 = ssub.s32 %s16, 1
        %s179 = sand.u32 %s29, 1
        %s180 = scalar_lea.sflag [#allocation3], %s179
        %s181 = sand.u32 %s29, 1
        %s182 = smul.addr %s181, 2
        %s183 = scalar_lea.vmem [#allocation2], %s182
        // Predicated region
        $region33: #{tpu_custom_call.1} parent=31 // pred_check
          %p184 = pneg %p42
        $region34: #{tpu_custom_call.1} parent=31 // pred_check_branch
          %186 = sbr.rel (%p184) target = $region36
        $region35: #{tpu_custom_call.1} parent=31 // pred_region
          %188 = dma.done %s180, 32
        $region36: #{tpu_custom_call.1} parent=31 // pred_fallthru
          _
        // Predicated region
        $region37: #{tpu_custom_call.1} parent=31 // pred_check
          %p189 = pneg %p63
        $region38: #{tpu_custom_call.1} parent=31 // pred_check_branch
          %191 = sbr.rel (%p189) target = $region40
        $region39: #{tpu_custom_call.1} parent=31 // pred_region
          %193 = dma.done [#allocation6], 16
        $region40: #{tpu_custom_call.1} parent=31 // pred_fallthru
          _
        // Predicated region
        $region41: #{tpu_custom_call.1} parent=31 // pred_check
          %p194 = pneg %p84
        $region42: #{tpu_custom_call.1} parent=31 // pred_check_branch
          %196 = sbr.rel (%p194) target = $region44
        $region43: #{tpu_custom_call.1} parent=31 // pred_region
          %198 = dma.done [#allocation6], 32
        $region44: #{tpu_custom_call.1} parent=31 // pred_fallthru
          _
        %s199 = sand.u32 %s29, 1
        %s200 = scalar_lea.sflag [#allocation3], %s199
        %s201 = sand.u32 %s29, 1
        %s202 = smul.addr %s201, 2
        %s203 = scalar_lea.vmem [#allocation2], %s202
        %p204 = pneg %p42
        %p205 = pneg %p39
        %p206 = pneg %p63
        %p207 = pneg %p60
        %p208 = pneg %p84
        %p209 = pneg %p81
        %p210 = pneg %p110
        %p211 = pneg %p107
        %s212 = sand.u32 %s97, 1
        %s213 = scalar_lea.sflag [#allocation4], %s212
        %s214 = sand.u32 %s97, 1
        %s215 = smul.addr %s214, 3
        %s216 = scalar_lea.vmem [#allocation8], %s215
        %v217 = vld [vmem:[%s183] sm:$0x3]
        %v218 = vld [vmem:[#allocation7] sm:$0x3]
        %v219 = vadd.f32 %v217, %v218
        %v220 = vld [vmem:[#allocation5] sm:$0x1]
        %v222 = vperm.slane %v219, 0
        %v223 = vperm.slane %v219, 1
        %224 = vrot.lane.b32.xlu0 %v222, 32
        %v225 = vpop.permute.xlu0 %224
        %226 = vrot.lane.b32.xlu0 %v223, 32
        %v227 = vpop.permute.xlu0 %226
        %vm228 = vcmask 261120
        %v229 = vsel %vm228, %v225, %v227
        %v231 = vsel %vm228, %v220, %v225
        %v233 = vrot.slane %v229, 7
        %v234 = vrot.slane %v227, 6
        %vm235 = vcmask 1040384
        %v236 = vsel %vm235, %v231, %v233
        %vm237 = vcmask 1041408
        %v238 = vsel %vm237, %v236, %v234
        %v240 = vlaneseq
        %vm241 = vcmp.ge.s32.totalorder %v240, 0
        %vm242 = vcmp.lt.s32.totalorder %v240, 288
        %vm243 = vmand %vm241, %vm242
        %244 = vst.msk [vmem:[%s216] sm:$0x7] %vm243, %v238
        %s245 = sand.u32 %s97, 1
        %s246 = scalar_lea.sflag [#allocation4], %s245
        %s247 = sand.u32 %s97, 1
        %s248 = smul.addr %s247, 3
        %s249 = scalar_lea.vmem [#allocation8], %s248
        // Predicated region
        $region45: #{tpu_custom_call.1} parent=31 // pred_check
          %p250 = pneg %p107
        $region46: #{tpu_custom_call.1} parent=31 // pred_check_branch
          %252 = sbr.rel (%p250) target = $region48
        $region47: #{tpu_custom_call.1} parent=31 // pred_region
          %254 = vsyncadd %s246, 0
          %s255 = smul.addr %s21, 3
          %s256 = scalar_lea.hbm %s3, %s255
          %s258 = sshll.u32 %s249, 4
          %s259 = int_to_ptr.vmem [resolvable:$true] %s258
          %s260 = sshll.u32 %s256, 4
          %s261 = int_to_ptr.hbm [resolvable:$true] %s260
          %263 = dma.vmem_to_hbm [thread:$0]  %s259, 48, %s261, %s246
        $region48: #{tpu_custom_call.1} parent=31 // pred_fallthru
          _
      $region32: #{tpu_custom_call.1} parent=5 // pred_fallthru
        _
      %p264 = scmp.le.s32.totalorder 2, %s16
      // Predicated region
      $region49: #{tpu_custom_call.1} parent=5 // pred_check
        %p265 = pneg %p264
      $region50: #{tpu_custom_call.1} parent=5 // pred_check_branch
        %267 = sbr.rel (%p265) target = $region52
      $region51: #{tpu_custom_call.1} parent=5 // pred_region
        %s268 = ssub.s32 %s16, 2
        // Predicated region
        $region53: #{tpu_custom_call.1} parent=51 // pred_check
          %p269 = pneg %p113
        $region54: #{tpu_custom_call.1} parent=51 // pred_check_branch
          %271 = sbr.rel (%p269) target = $region56
        $region55: #{tpu_custom_call.1} parent=51 // pred_region
          %s272 = sand.u32 %s98, 1
          %s273 = scalar_lea.sflag [#allocation4], %s272
          %s274 = sand.u32 %s98, 1
          %s275 = smul.addr %s274, 3
          %s276 = scalar_lea.vmem [#allocation8], %s275
          %278 = dma.done %s273, 48
        $region56: #{tpu_custom_call.1} parent=51 // pred_fallthru
          _
      $region52: #{tpu_custom_call.1} parent=5 // pred_fallthru
        _
    $region6: #{tpu_custom_call.1} parent=1 // loop_footer
      %s20 = sadd.s32 1, %s16
    $region7: #{tpu_custom_call.1} parent=1 // loop_footer_branch
      %15 = sbr.rel target = $region3
    $region8: #{tpu_custom_call.1} parent=1 // loop_exit
      _
    %279 = vsyncpa [#allocation3], 1
    %s280 = scalar_lea.sflag [#allocation3], 1
    %281 = vsyncpa %s280, 1
    %282 = vsyncpa [#allocation6], 1
    %283 = vsyncpa [#allocation4], 1
    %s284 = scalar_lea.sflag [#allocation4], 1
    %285 = vsyncpa %s284, 1

// kernel: tpu_custom_call.1
$region0: #{tpu_custom_call.1}
  #allocation0 [shape = 'u32[]', space=smem, size = 0x4, offset = 0x4, fixed_abs, tag = 'smem constant byte address 0x4 - core index']
  #allocation1 [shape = 'u32[72,128]{1,0:T(1,128)}', space=vmem, size = 0x9000, scoped, tag = 'internal scratch']
  %s0 = inlined_call_operand.hbm [shape: f32[2,1,256], index: 0, kind: input, shape index: {}]
  %s1 = inlined_call_operand.hbm [shape: f32[1,32], index: 1, kind: input, shape index: {}]
  %s2 = inlined_call_operand.hbm [shape: f32[1,256], index: 2, kind: input, shape index: {}]
  %s3 = inlined_call_operand.hbm [shape: f32[2,1,288], index: 3, kind: output, shape index: {}]
  %s4 = sld [smem:[#allocation0]]
  $region57: #{tpu_custom_call.1} parent=0
    _
  %s6 = ssub.s32 1, %s4
  %s7 = scalar_select 0, %s6, %s4
  $region1: #{tpu_custom_call.1} parent=0
    #allocation2 [shape = 'u8[2048]{0}', space=vmem, size = 0x800, scoped, tag = 'input window, operand 0']
    #allocation3 [shape = 's32[2]{0}', space=sflag, size = 0x8, scoped, tag = 'scoped memory for tpu_custom_call.1']
    #allocation4 [shape = 's32[2]{0}', space=sflag, size = 0x8, scoped, tag = 'scoped memory for tpu_custom_call.1']
    #allocation5 [shape = 'u8[512]{0}', space=vmem, size = 0x400, scoped, tag = 'input window, operand 1, single buffered']
    #allocation6 [shape = 's32[1]{0}', space=sflag, size = 0x4, scoped, tag = 'scoped memory for tpu_custom_call.1']
    #allocation7 [shape = 'u8[1024]{0}', space=vmem, size = 0x400, scoped, tag = 'input window, operand 2, single buffered']
    #allocation8 [shape = 'u8[3072]{0}', space=vmem, size = 0xc00, scoped, tag = 'output window, operand 0']
    %8 = vsyncpa [#allocation3], 0
    %s9 = scalar_lea.sflag [#allocation3], 1
    %10 = vsyncpa %s9, 0
    %11 = vsyncpa [#allocation6], 0
    %12 = vsyncpa [#allocation4], 0
    %s13 = scalar_lea.sflag [#allocation4], 1
    %14 = vsyncpa %s13, 0
    loop: start=0, step=1, limit=4
    $region2: #{tpu_custom_call.1} parent=1 // loop_pre_header
      _
    $region3: #{tpu_custom_call.1} parent=1 // loop_header
      %s16 = sphi 0, %s20
      %p17 = scmp.ge.s32.totalorder %s16, 4
      %s26 = sphi 0, %s28
      %s29 = sphi 0, %s26
      %s30 = sphi 0, %s29
      %s46 = sphi 0, %s30
      %s50 = sphi 0, %s50
      %s52 = sphi 0, %s50
      %s53 = sphi 0, %s52
      %s67 = sphi 0, %s53
      %s71 = sphi 0, %s71
      %s73 = sphi 0, %s71
      %s74 = sphi 0, %s73
      %s88 = sphi 0, %s74
      %s94 = sphi 0, %s96
      %s97 = sphi 0, %s94
      %s98 = sphi 0, %s97
      %s114 = sphi 0, %s98
    $region4: #{tpu_custom_call.1} parent=1 // loop_header_branch
      %19 = sbr.rel (%p17) target = $region8
    $region5: #{tpu_custom_call.1} parent=1 // loop_body
      %s21 = ssub.s32 %s16, 1
      %s22 = ssub.s32 %s16, 2
      %s23 = sadd.s32 %s16, 1
      %s24 = ssub.s32 %s16, %s23
      %p25 = scmp.eq.s32.totalorder %s24, 0
      %s27 = sadd.s32 %s26, 1
      %s28 = scalar_select %p25, %s26, %s27
      %p31 = pneg %p25
      %p32 = scmp.eq.s32.totalorder %s16, 1
      %p33 = por %p31, %p32
      %p34 = scmp.ne.s32.totalorder %s26, %s29
      %p35 = scmp.eq.s32.totalorder %s16, 0
      %p36 = por %p34, %p35
      %p37 = scmp.ne.s32.totalorder %s26, %s29
      %p38 = scmp.eq.s32.totalorder %s21, 1
      %p39 = por %p37, %p38
      %p40 = scmp.ne.s32.totalorder %s29, %s30
      %p41 = scmp.eq.s32.totalorder %s21, 0
      %p42 = por %p40, %p41
      %p43 = scmp.ne.s32.totalorder %s29, %s30
      %p44 = scmp.eq.s32.totalorder %s22, 1
      %p45 = por %p43, %p44
      %p47 = scmp.ne.s32.totalorder %s30, %s46
      %p48 = scmp.eq.s32.totalorder %s22, 0
      %p49 = por %p47, %p48
      %s51 = sadd.s32 %s50, 1
      %p54 = scmp.eq.s32.totalorder %s16, 1
      %p55 = scmp.ne.s32.totalorder %s50, %s52
      %p56 = scmp.eq.s32.totalorder %s16, 0
      %p57 = por %p55, %p56
      %p58 = scmp.ne.s32.totalorder %s50, %s52
      %p59 = scmp.eq.s32.totalorder %s21, 1
      %p60 = por %p58, %p59
      %p61 = scmp.ne.s32.totalorder %s52, %s53
      %p62 = scmp.eq.s32.totalorder %s21, 0
      %p63 = por %p61, %p62
      %p64 = scmp.ne.s32.totalorder %s52, %s53
      %p65 = scmp.eq.s32.totalorder %s22, 1
      %p66 = por %p64, %p65
      %p68 = scmp.ne.s32.totalorder %s53, %s67
      %p69 = scmp.eq.s32.totalorder %s22, 0
      %p70 = por %p68, %p69
      %s72 = sadd.s32 %s71, 1
      %p75 = scmp.eq.s32.totalorder %s16, 1
      %p76 = scmp.ne.s32.totalorder %s71, %s73
      %p77 = scmp.eq.s32.totalorder %s16, 0
      %p78 = por %p76, %p77
      %p79 = scmp.ne.s32.totalorder %s71, %s73
      %p80 = scmp.eq.s32.totalorder %s21, 1
      %p81 = por %p79, %p80
      %p82 = scmp.ne.s32.totalorder %s73, %s74
      %p83 = scmp.eq.s32.totalorder %s21, 0
      %p84 = por %p82, %p83
      %p85 = scmp.ne.s32.totalorder %s73, %s74
      %p86 = scmp.eq.s32.totalorder %s22, 1
      %p87 = por %p85, %p86
      %p89 = scmp.ne.s32.totalorder %s74, %s88
      %p90 = scmp.eq.s32.totalorder %s22, 0
      %p91 = por %p89, %p90
      %s92 = ssub.s32 %s16, %s23
      %p93 = scmp.eq.s32.totalorder %s92, 0
      %s95 = sadd.s32 %s94, 1
      %s96 = scalar_select %p93, %s94, %s95
      %p99 = pneg %p93
      %p100 = scmp.eq.s32.totalorder %s16, 1
      %p101 = por %p99, %p100
      %p102 = scmp.ne.s32.totalorder %s94, %s97
      %p103 = scmp.eq.s32.totalorder %s16, 0
      %p104 = por %p102, %p103
      %p105 = scmp.ne.s32.totalorder %s94, %s97
      %p106 = scmp.eq.s32.totalorder %s21, 1
      %p107 = por %p105, %p106
      %p108 = scmp.ne.s32.totalorder %s97, %s98
      %p109 = scmp.eq.s32.totalorder %s21, 0
      %p110 = por %p108, %p109
      %p111 = scmp.ne.s32.totalorder %s97, %s98
      %p112 = scmp.eq.s32.totalorder %s22, 1
      %p113 = por %p111, %p112
      %p115 = scmp.ne.s32.totalorder %s98, %s114
      %p116 = scmp.eq.s32.totalorder %s22, 0
      %p117 = por %p115, %p116
      %p118 = scmp.le.s32.totalorder 1, %s16
      %p119 = scmp.lt.s32.totalorder %s16, 3
      %p120 = pnand %p118, %p119
      %p121 = pneg %p120
      // Predicated region
      $region9: #{tpu_custom_call.1} parent=5 // pred_check
        _
      $region10: #{tpu_custom_call.1} parent=5 // pred_check_branch
        %123 = sbr.rel (%p120) target = $region12
      $region11: #{tpu_custom_call.1} parent=5 // pred_region
        %s124 = ssub.s32 %s16, 1
        // Predicated region
        $region13: #{tpu_custom_call.1} parent=11 // pred_check
          %p125 = pneg %p63
        $region14: #{tpu_custom_call.1} parent=11 // pred_check_branch
          %127 = sbr.rel (%p125) target = $region16
        $region15: #{tpu_custom_call.1} parent=11 // pred_region
          %129 = vsyncadd [#allocation6], 0
          %s131 = sshll.u32 %s1, 4
          %s132 = int_to_ptr.hbm [resolvable:$true] %s131
          %s133 = sshll.u32 [#allocation5], 4
          %s134 = int_to_ptr.vmem [resolvable:$true] %s133
          %136 = dma.hbm_to_vmem [thread:$0]  %s132, 16, %s134, [#allocation6]
        $region16: #{tpu_custom_call.1} parent=11 // pred_fallthru
          _
        // Predicated region
        $region17: #{tpu_custom_call.1} parent=11 // pred_check
          %p137 = pneg %p84
        $region18: #{tpu_custom_call.1} parent=11 // pred_check_branch
          %139 = sbr.rel (%p137) target = $region20
        $region19: #{tpu_custom_call.1} parent=11 // pred_region
          %141 = vsyncadd [#allocation6], 0
          %s143 = sshll.u32 %s2, 4
          %s144 = int_to_ptr.hbm [resolvable:$true] %s143
          %s145 = sshll.u32 [#allocation7], 4
          %s146 = int_to_ptr.vmem [resolvable:$true] %s145
          %148 = dma.hbm_to_vmem [thread:$0]  %s144, 32, %s146, [#allocation6]
        $region20: #{tpu_custom_call.1} parent=11 // pred_fallthru
          _
      $region12: #{tpu_custom_call.1} parent=5 // pred_fallthru
        _
      %p149 = scmp.lt.s32.totalorder %s16, 2
      // Predicated region
      $region21: #{tpu_custom_call.1} parent=5 // pred_check
        %p150 = pneg %p149
      $region22: #{tpu_custom_call.1} parent=5 // pred_check_branch
        %152 = sbr.rel (%p150) target = $region24
      $region23: #{tpu_custom_call.1} parent=5 // pred_region
        // Predicated region
        $region25: #{tpu_custom_call.1} parent=23 // pred_check
          %p153 = pneg %p36
        $region26: #{tpu_custom_call.1} parent=23 // pred_check_branch
          %155 = sbr.rel (%p153) target = $region28
        $region27: #{tpu_custom_call.1} parent=23 // pred_region
          %s156 = sand.u32 %s26, 1
          %s157 = scalar_lea.sflag [#allocation3], %s156
          %s158 = sand.u32 %s26, 1
          %s159 = smul.addr %s158, 2
          %s160 = scalar_lea.vmem [#allocation2], %s159
          %162 = vsyncadd %s157, 0
          %s163 = smul.addr %s16, 2
          %s164 = scalar_lea.hbm %s0, %s163
          %s166 = sshll.u32 %s164, 4
          %s167 = int_to_ptr.hbm [resolvable:$true] %s166
          %s168 = sshll.u32 %s160, 4
          %s169 = int_to_ptr.vmem [resolvable:$true] %s168
          %171 = dma.hbm_to_vmem [thread:$0]  %s167, 32, %s169, %s157
        $region28: #{tpu_custom_call.1} parent=23 // pred_fallthru
          _
      $region24: #{tpu_custom_call.1} parent=5 // pred_fallthru
        _
      %p172 = scmp.le.s32.totalorder 1, %s16
      %p173 = scmp.lt.s32.totalorder %s16, 3
      %p174 = pnand %p172, %p173
      %p175 = pneg %p174
      // Predicated region
      $region29: #{tpu_custom_call.1} parent=5 // pred_check
        _
      $region30: #{tpu_custom_call.1} parent=5 // pred_check_branch
        %177 = sbr.rel (%p174) target = $region32
      $region31: #{tpu_custom_call.1} parent=5 // pred_region
        %s178 = ssub.s32 %s16, 1
        %s179 = sand.u32 %s29, 1
        %s180 = scalar_lea.sflag [#allocation3], %s179
        %s181 = sand.u32 %s29, 1
        %s182 = smul.addr %s181, 2
        %s183 = scalar_lea.vmem [#allocation2], %s182
        // Predicated region
        $region33: #{tpu_custom_call.1} parent=31 // pred_check
          %p184 = pneg %p42
        $region34: #{tpu_custom_call.1} parent=31 // pred_check_branch
          %186 = sbr.rel (%p184) target = $region36
        $region35: #{tpu_custom_call.1} parent=31 // pred_region
          %188 = dma.done %s180, 32
        $region36: #{tpu_custom_call.1} parent=31 // pred_fallthru
          _
        // Predicated region
        $region37: #{tpu_custom_call.1} parent=31 // pred_check
          %p189 = pneg %p63
        $region38: #{tpu_custom_call.1} parent=31 // pred_check_branch
          %191 = sbr.rel (%p189) target = $region40
        $region39: #{tpu_custom_call.1} parent=31 // pred_region
          %193 = dma.done [#allocation6], 16
        $region40: #{tpu_custom_call.1} parent=31 // pred_fallthru
          _
        // Predicated region
        $region41: #{tpu_custom_call.1} parent=31 // pred_check
          %p194 = pneg %p84
        $region42: #{tpu_custom_call.1} parent=31 // pred_check_branch
          %196 = sbr.rel (%p194) target = $region44
        $region43: #{tpu_custom_call.1} parent=31 // pred_region
          %198 = dma.done [#allocation6], 32
        $region44: #{tpu_custom_call.1} parent=31 // pred_fallthru
          _
        %s199 = sand.u32 %s29, 1
        %s200 = scalar_lea.sflag [#allocation3], %s199
        %s201 = sand.u32 %s29, 1
        %s202 = smul.addr %s201, 2
        %s203 = scalar_lea.vmem [#allocation2], %s202
        %p204 = pneg %p42
        %p205 = pneg %p39
        %p206 = pneg %p63
        %p207 = pneg %p60
        %p208 = pneg %p84
        %p209 = pneg %p81
        %p210 = pneg %p110
        %p211 = pneg %p107
        %s212 = sand.u32 %s97, 1
        %s213 = scalar_lea.sflag [#allocation4], %s212
        %s214 = sand.u32 %s97, 1
        %s215 = smul.addr %s214, 3
        %s216 = scalar_lea.vmem [#allocation8], %s215
        %v217 = vld [vmem:[%s183] sm:$0x3]
        %v218 = vld [vmem:[#allocation7] sm:$0x3]
        %v219 = vadd.f32 %v217, %v218
        %v220 = vld [vmem:[#allocation5] sm:$0x1]
        %v222 = vperm.slane %v219, 0
        %v223 = vperm.slane %v219, 1
        %224 = vrot.lane.b32.xlu0 %v222, 32
        %v225 = vpop.permute.xlu0 %224
        %226 = vrot.lane.b32.xlu0 %v223, 32
        %v227 = vpop.permute.xlu0 %226
        %vm228 = vcmask 261120
        %v229 = vsel %vm228, %v225, %v227
        %v231 = vsel %vm228, %v220, %v225
        %v233 = vrot.slane %v229, 7
        %v234 = vrot.slane %v227, 6
        %vm235 = vcmask 1040384
        %v236 = vsel %vm235, %v231, %v233
        %vm237 = vcmask 1041408
        %v238 = vsel %vm237, %v236, %v234
        %v240 = vlaneseq
        %vm241 = vcmp.ge.s32.totalorder %v240, 0
        %vm242 = vcmp.lt.s32.totalorder %v240, 288
        %vm243 = vmand %vm241, %vm242
        %244 = vst.msk [vmem:[%s216] sm:$0x7] %vm243, %v238
        %s245 = sand.u32 %s97, 1
        %s246 = scalar_lea.sflag [#allocation4], %s245
        %s247 = sand.u32 %s97, 1
        %s248 = smul.addr %s247, 3
        %s249 = scalar_lea.vmem [#allocation8], %s248
        // Predicated region
        $region45: #{tpu_custom_call.1} parent=31 // pred_check
          %p250 = pneg %p107
        $region46: #{tpu_custom_call.1} parent=31 // pred_check_branch
          %252 = sbr.rel (%p250) target = $region48
        $region47: #{tpu_custom_call.1} parent=31 // pred_region
          %254 = vsyncadd %s246, 0
          %s255 = smul.addr %s21, 3
          %s256 = scalar_lea.hbm %s3, %s255
          %s258 = sshll.u32 %s249, 4
          %s259 = int_to_ptr.vmem [resolvable:$true] %s258
          %s260 = sshll.u32 %s256, 4
          %s261 = int_to_ptr.hbm [resolvable:$true] %s260
          %263 = dma.vmem_to_hbm [thread:$0]  %s259, 48, %s261, %s246
        $region48: #{tpu_custom_call.1} parent=31 // pred_fallthru
          _
      $region32: #{tpu_custom_call.1} parent=5 // pred_fallthru
        _
      %p264 = scmp.le.s32.totalorder 2, %s16
      // Predicated region
      $region49: #{tpu_custom_call.1} parent=5 // pred_check
        %p265 = pneg %p264
      $region50: #{tpu_custom_call.1} parent=5 // pred_check_branch
        %267 = sbr.rel (%p265) target = $region52
      $region51: #{tpu_custom_call.1} parent=5 // pred_region
        %s268 = ssub.s32 %s16, 2
        // Predicated region
        $region53: #{tpu_custom_call.1} parent=51 // pred_check
          %p269 = pneg %p113
        $region54: #{tpu_custom_call.1} parent=51 // pred_check_branch
          %271 = sbr.rel (%p269) target = $region56
        $region55: #{tpu_custom_call.1} parent=51 // pred_region
          %s272 = sand.u32 %s98, 1
          %s273 = scalar_lea.sflag [#allocation4], %s272
          %s274 = sand.u32 %s98, 1
          %s275 = smul.addr %s274, 3
          %s276 = scalar_lea.vmem [#allocation8], %s275
          %278 = dma.done %s273, 48
        $region56: #{tpu_custom_call.1} parent=51 // pred_fallthru
          _
      $region52: #{tpu_custom_call.1} parent=5 // pred_fallthru
        _
    $region6: #{tpu_custom_call.1} parent=1 // loop_footer
      %s20 = sadd.s32 1, %s16
    $region7: #{tpu_custom_call.1} parent=1 // loop_footer_branch
      %15 = sbr.rel target = $region3
    $region8: #{tpu_custom_call.1} parent=1 // loop_exit
      _
    %279 = vsyncpa [#allocation3], 1
    %s280 = scalar_lea.sflag [#allocation3], 1
    %281 = vsyncpa %s280, 1
    %282 = vsyncpa [#allocation6], 1
    %283 = vsyncpa [#allocation4], 1
    %s284 = scalar_lea.sflag [#allocation4], 1
    %285 = vsyncpa %s284, 1

</llo_original>
